<compile_context>
chip_gen: v7x
topology: tpu7x:2x2x1
jax: 0.10.0
libtpu: 0.0.40
codegen_flags: <defaults>
</compile_context>

<pallas_src>
from functools import partial
from typing import Iterable
import math

import jax
import jax.numpy as jnp
from jax import lax
from jax.experimental import pallas as pl
from jax.experimental.pallas import tpu as pltpu


def to_ntuple(val, n):
    if isinstance(val, Iterable):
        out = tuple(val)
        if len(out) != n:
            raise ValueError(f"Cannot cast tuple of length {len(out)} to length {n}.")
        return out
    return n * (val,)


def _round_up(x, m):
    return ((x + m - 1) // m) * m


def _tpu_vmem_bytes():
    try:
        info = pltpu.get_tpu_info()
        return int(getattr(info, "vmem_capacity_bytes", 64 << 20))
    except Exception:
        return 64 << 20


# ----------------------------------------------------------------------------
# Pallas kernel: per-frequency grouped complex channel contraction
#   out[b, o, p] = sum_c sig[b, c, p] * ker[o, c, p]   (complex, per group)
# Frequency bins are flattened into the last (lane) axis.
# ----------------------------------------------------------------------------
def _cmul_kernel(sig_ref, ker_ref, out_ref):
    # sig_ref: (2, 1, Cg, Bt, TP)   [re/im, group, in-chan, batch, freq]
    # ker_ref: (2, 1, Cg, Ot, TP)   [re/im, group, in-chan, out-chan, freq]
    # out_ref: (2, Bt, 1, Ot, TP)
    Cg = sig_ref.shape[2]
    Bt = sig_ref.shape[3]
    Ot = ker_ref.shape[3]
    TP = sig_ref.shape[4]

    # The reduction axis (Cg) sits on a leading (untiled) ref dimension so it
    # can be indexed dynamically; accumulation stays in (Bt, Ot, TP) f32
    # accumulators: pure VPU mul/add, no (Ot, Cg, TP) intermediate, no
    # cross-sublane XLU reduction.
    def body(c, carry):
        acc_r, acc_i = carry
        sr = sig_ref[0, 0, c]          # (Bt, TP)
        si = sig_ref[1, 0, c]
        kr = ker_ref[0, 0, c]          # (Ot, TP)
        ki = ker_ref[1, 0, c]
        sr_b = sr[:, None, :]
        si_b = si[:, None, :]
        kr_b = kr[None, :, :]
        ki_b = ki[None, :, :]
        acc_r = acc_r + (sr_b * kr_b - si_b * ki_b)
        acc_i = acc_i + (si_b * kr_b + sr_b * ki_b)
        return acc_r, acc_i

    zero = jnp.zeros((Bt, Ot, TP), jnp.float32)
    unroll = Cg if Cg <= 8 else 8
    acc_r, acc_i = lax.fori_loop(0, Cg, body, (zero, zero), unroll=unroll)
    out_ref[0, :, 0, :, :] = acc_r
    out_ref[1, :, 0, :, :] = acc_i


def complex_channel_matmul(sig_fr, ker_fr, groups=1):
    """Equivalent of complex_matmul_fi at ber=0 (grouped complex matmul)."""
    B, C_in = sig_fr.shape[:2]
    C_out, Cg = ker_fr.shape[:2]
    spatial = sig_fr.shape[2:]
    P = int(math.prod(spatial))
    G = groups
    Og = C_out // G
    assert Cg == C_in // G

    # Stacked real/imag with the reduction (Cg) axis leading the tiled dims so
    # the kernel can index it dynamically.
    sig_ri = jnp.stack([jnp.real(sig_fr), jnp.imag(sig_fr)]).astype(jnp.float32)
    sig_ri = sig_ri.reshape(2, B, G, Cg, P).transpose(0, 2, 3, 1, 4)   # (2,G,Cg,B,P)
    ker_ri = jnp.stack([jnp.real(ker_fr), jnp.imag(ker_fr)]).astype(jnp.float32)
    ker_ri = ker_ri.reshape(2, G, Og, Cg, P).transpose(0, 1, 3, 2, 4)  # (2,G,Cg,Og,P)

    # ---- tile selection (VMEM-budget driven; works for v5e/v6e/v7x) --------
    bt = B if B <= 8 else 8                 # batch tile (full B or sublane-aligned)
    og_t = Og if Og <= 256 else 256         # output-channel tile

    phys_vmem = _tpu_vmem_bytes()
    budget = int(min(phys_vmem, 128 << 20) * 0.45)

    def per_lane_bytes(ot):
        # f32, re+im, double-buffered sig/ker/out blocks + single accumulators
        return 4 * 2 * (2 * (Cg * bt + Cg * ot + bt * ot) + bt * ot)

    while og_t > 8 and budget // per_lane_bytes(og_t) < 128:
        og_t = max(8, (og_t // 2 // 8) * 8)

    tile_p = (budget // per_lane_bytes(og_t) // 128) * 128
    tile_p = max(128, min(tile_p, 4096, _round_up(P, 128)))

    footprint = per_lane_bytes(og_t) * tile_p
    vmem_limit = int(min(max(2 * footprint, 32 << 20), int(phys_vmem * 0.75)))

    # Grid ordered so the batch tile is innermost: the ker block index does not
    # depend on it, so consecutive steps reuse the resident weight-spectrum
    # block (no per-batch re-streaming of kernel_fr).
    grid = (G, pl.cdiv(Og, og_t), pl.cdiv(P, tile_p), pl.cdiv(B, bt))

    sig_spec = pl.BlockSpec((2, 1, Cg, bt, tile_p),
                            lambda g, ot, pt, bi: (0, g, 0, bi, pt))
    ker_spec = pl.BlockSpec((2, 1, Cg, og_t, tile_p),
                            lambda g, ot, pt, bi: (0, g, 0, ot, pt))
    out_spec = pl.BlockSpec((2, bt, 1, og_t, tile_p),
                            lambda g, ot, pt, bi: (0, bi, g, ot, pt))

    out = pl.pallas_call(
        _cmul_kernel,
        out_shape=jax.ShapeDtypeStruct((2, B, G, Og, P), jnp.float32),
        grid_spec=pltpu.PrefetchScalarGridSpec(
            num_scalar_prefetch=0,
            grid=grid,
            in_specs=[sig_spec, ker_spec],
            out_specs=out_spec,
        ),
        compiler_params=pltpu.CompilerParams(
            dimension_semantics=("parallel", "parallel", "parallel", "parallel"),
            vmem_limit_bytes=vmem_limit),
    )(sig_ri, ker_ri)

    out_c = lax.complex(out[0], out[1])              # (B, G, Og, P)
    return out_c.reshape(B, C_out, *spatial)


# ----------------------------------------------------------------------------
# fi_fft_conv forward (ber=0 deterministic path)
# ----------------------------------------------------------------------------
def fi_fft_conv(signal, kernel, bias=None, padding=0, padding_mode="constant",
                stride=1, dilation=1, groups=1, ber=0.0, bits=8):
    # TODO(synk): Quant(bits) and the random-bit-flip fault injection
    # (quan_FI / opt_fi / operation_fi) use undefined CUDA helpers and RNG;
    # with ber=0 they are exact identities, which is what is reproduced here.
    del ber, bits
    n = signal.ndim - 2
    padding_ = to_ntuple(padding, n)
    stride_ = to_ntuple(stride, n)
    dilation_ = to_ntuple(dilation, n)

    # kernel dilation (torch.kron with a delta offset, then cutoff)
    if any(d != 1 for d in dilation_):
        O, Cg = kernel.shape[:2]
        ks = kernel.shape[2:]
        dks = tuple((k - 1) * d + 1 for k, d in zip(ks, dilation_))
        dk = jnp.zeros((O, Cg) + dks, kernel.dtype)
        idx = (slice(None), slice(None)) + tuple(slice(None, None, d) for d in dilation_)
        kernel = dk.at[idx].set(kernel)

    # signal padding (matches f.pad with reversed per-dim pairs)
    padcfg = [(0, 0), (0, 0)] + [(p, p) for p in padding_]
    mode = {"constant": "constant", "reflect": "reflect",
            "replicate": "edge", "circular": "wrap"}[padding_mode]
    signal = jnp.pad(signal, padcfg, mode=mode)

    # pad last spatial dim to even length for rfft
    if signal.shape[-1] % 2 != 0:
        signal_ = jnp.pad(signal, [(0, 0)] * (signal.ndim - 1) + [(0, 1)])
    else:
        signal_ = signal

    fft_axes = tuple(range(2, signal.ndim))
    signal_fr = jnp.fft.rfftn(signal_, axes=fft_axes)

    kpad = [(0, 0), (0, 0)] + [(0, signal_.shape[i] - kernel.shape[i])
                               for i in range(2, signal_.ndim)]
    padded_kernel = jnp.pad(kernel, kpad)
    kernel_fr = jnp.fft.rfftn(padded_kernel, axes=fft_axes)
    kernel_fr = jnp.conj(kernel_fr)            # kernel_fr.imag *= -1

    output_fr = complex_channel_matmul(signal_fr, kernel_fr, groups=groups)
    output = jnp.fft.irfftn(output_fr, axes=fft_axes)

    crop = (slice(None), slice(None)) + tuple(
        slice(0, signal.shape[i] - kernel.shape[i] + 1, stride_[i - 2])
        for i in range(2, signal.ndim))
    output = output[crop]

    if bias is not None:
        output = output + bias.reshape((1, -1) + (1,) * n)
    return output


class fi_FFTConv:
    """JAX port of the PyTorch fi_FFTConv module (forward only, ber=0 path)."""

    def __init__(self, in_channels, out_channels, kernel_size, ber, bit,
                 stride=1, padding=0, padding_mode="constant", dilation=1,
                 groups=1, bias=True, ndim=2, key=None):
        if in_channels % groups or out_channels % groups:
            raise ValueError("channels must be divisible by groups")
        self.ber, self.bit = ber, bit
        self.stride, self.padding = stride, padding
        self.padding_mode, self.dilation, self.groups = padding_mode, dilation, groups
        ks = to_ntuple(kernel_size, ndim)
        key = jax.random.PRNGKey(0) if key is None else key
        kw, kb = jax.random.split(key)
        self.weight = jax.random.normal(
            kw, (out_channels, in_channels // groups) + ks, jnp.float32)
        self.bias = jax.random.normal(kb, (out_channels,), jnp.float32) if bias else None
        # jit the whole forward so the surrounding pads / reshapes / crop fuse
        self._forward = jax.jit(partial(
            fi_fft_conv, padding=self.padding, padding_mode=self.padding_mode,
            stride=self.stride, dilation=self.dilation, groups=self.groups,
            ber=self.ber, bits=self.bit))

    def __call__(self, signal):
        return self._forward(signal, self.weight, self.bias)


if __name__ == "__main__":
    key = jax.random.PRNGKey(0)
    kx, kmod1, kmod2 = jax.random.split(key, 3)

    B, Cin, Cout, H, W, K = 2, 4, 8, 16, 16, 3
    x = jax.random.normal(kx, (B, Cin, H, W), jnp.float32)

    # groups=1
    mod = fi_FFTConv(Cin, Cout, K, ber=0.0, bit=8, stride=1, padding=1,
                     dilation=1, groups=1, bias=True, ndim=2, key=kmod1)
    out = jax.block_until_ready(mod(x))
    ref = lax.conv_general_dilated(
        x, mod.weight, window_strides=(1, 1), padding=[(1, 1), (1, 1)],
        dimension_numbers=("NCHW", "OIHW", "NCHW")) + mod.bias.reshape(1, -1, 1, 1)
    assert out.shape == (B, Cout, H, W)
    assert jnp.allclose(out, ref, atol=2e-2, rtol=2e-2)

    # groups=2 (exercises the group grid axis and channel-split layouts)
    mod2 = fi_FFTConv(Cin, Cout, K, ber=0.0, bit=8, stride=1, padding=1,
                      dilation=1, groups=2, bias=True, ndim=2, key=kmod2)
    out2 = jax.block_until_ready(mod2(x))
    ref2 = lax.conv_general_dilated(
        x, mod2.weight, window_strides=(1, 1), padding=[(1, 1), (1, 1)],
        dimension_numbers=("NCHW", "OIHW", "NCHW"),
        feature_group_count=2) + mod2.bias.reshape(1, -1, 1, 1)
    assert out2.shape == (B, Cout, H, W)
    assert jnp.allclose(out2, ref2, atol=2e-2, rtol=2e-2)

    print("KERNEL_OK")
</pallas_src>

<mosaic_0001>
module attributes {stable_mosaic.version = 11 : i64} {
  func.func @_cmul_kernel(%arg0: i32, %arg1: i32, %arg2: i32, %arg3: i32, %arg4: memref<2x1x4x2x256xf32, #tpu.memory_space<vmem>>, %arg5: memref<2x1x4x8x256xf32, #tpu.memory_space<vmem>>, %arg6: memref<2x2x1x8x256xf32, #tpu.memory_space<vmem>>) attributes {dimension_semantics = [#tpu.dimension_semantics<parallel>, #tpu.dimension_semantics<parallel>, #tpu.dimension_semantics<parallel>, #tpu.dimension_semantics<parallel>], iteration_bounds = array<i64: 1, 1, 1, 1>, scalar_prefetch = 0 : i64, scratch_operands = 0 : i64, tpu.core_type = #tpu.core_type<tc>, window_params = [{transform_indices = @transform_0, window_bounds = array<i64: 2, 1, 4, 2, 256>}, {transform_indices = @transform_1, window_bounds = array<i64: 2, 1, 4, 8, 256>}, {transform_indices = @transform_2, window_bounds = array<i64: 2, 2, 1, 8, 256>}]} {
    %cst = arith.constant 0.000000e+00 : f32
    %0 = vector.broadcast %cst : f32 to vector<2x8x256xf32>
    %c0_i32 = arith.constant 0 : i32
    %c0 = arith.constant 0 : index
    %c0_0 = arith.constant 0 : index
    %1 = arith.index_cast %c0_i32 : i32 to index
    %c0_1 = arith.constant 0 : index
    %c0_2 = arith.constant 0 : index
    %2 = vector.load %arg4[%c0, %c0_0, %1, %c0_1, %c0_2] : memref<2x1x4x2x256xf32, #tpu.memory_space<vmem>>, vector<1x1x1x2x256xf32>
    %3 = vector.shape_cast %2 : vector<1x1x1x2x256xf32> to vector<2x256xf32>
    %c1 = arith.constant 1 : index
    %c0_3 = arith.constant 0 : index
    %4 = arith.index_cast %c0_i32 : i32 to index
    %c0_4 = arith.constant 0 : index
    %c0_5 = arith.constant 0 : index
    %5 = vector.load %arg4[%c1, %c0_3, %4, %c0_4, %c0_5] : memref<2x1x4x2x256xf32, #tpu.memory_space<vmem>>, vector<1x1x1x2x256xf32>
    %6 = vector.shape_cast %5 : vector<1x1x1x2x256xf32> to vector<2x256xf32>
    %c0_6 = arith.constant 0 : index
    %c0_7 = arith.constant 0 : index
    %7 = arith.index_cast %c0_i32 : i32 to index
    %c0_8 = arith.constant 0 : index
    %c0_9 = arith.constant 0 : index
    %8 = vector.load %arg5[%c0_6, %c0_7, %7, %c0_8, %c0_9] : memref<2x1x4x8x256xf32, #tpu.memory_space<vmem>>, vector<1x1x1x8x256xf32>
    %9 = vector.shape_cast %8 : vector<1x1x1x8x256xf32> to vector<8x256xf32>
    %c1_10 = arith.constant 1 : index
    %c0_11 = arith.constant 0 : index
    %10 = arith.index_cast %c0_i32 : i32 to index
    %c0_12 = arith.constant 0 : index
    %c0_13 = arith.constant 0 : index
    %11 = vector.load %arg5[%c1_10, %c0_11, %10, %c0_12, %c0_13] : memref<2x1x4x8x256xf32, #tpu.memory_space<vmem>>, vector<1x1x1x8x256xf32>
    %12 = vector.shape_cast %11 : vector<1x1x1x8x256xf32> to vector<8x256xf32>
    %13 = vector.shape_cast %3 : vector<2x256xf32> to vector<2x1x256xf32>
    %14 = vector.shape_cast %6 : vector<2x256xf32> to vector<2x1x256xf32>
    %15 = vector.shape_cast %9 : vector<8x256xf32> to vector<1x8x256xf32>
    %16 = vector.shape_cast %12 : vector<8x256xf32> to vector<1x8x256xf32>
    %17 = vector.broadcast %13 : vector<2x1x256xf32> to vector<2x8x256xf32>
    %18 = vector.broadcast %15 : vector<1x8x256xf32> to vector<2x8x256xf32>
    %19 = arith.mulf %17, %18 : vector<2x8x256xf32>
    %20 = vector.broadcast %14 : vector<2x1x256xf32> to vector<2x8x256xf32>
    %21 = vector.broadcast %16 : vector<1x8x256xf32> to vector<2x8x256xf32>
    %22 = arith.mulf %20, %21 : vector<2x8x256xf32>
    %23 = arith.subf %19, %22 : vector<2x8x256xf32>
    %24 = arith.addf %0, %23 : vector<2x8x256xf32>
    %25 = vector.broadcast %14 : vector<2x1x256xf32> to vector<2x8x256xf32>
    %26 = vector.broadcast %15 : vector<1x8x256xf32> to vector<2x8x256xf32>
    %27 = arith.mulf %25, %26 : vector<2x8x256xf32>
    %28 = vector.broadcast %13 : vector<2x1x256xf32> to vector<2x8x256xf32>
    %29 = vector.broadcast %16 : vector<1x8x256xf32> to vector<2x8x256xf32>
    %30 = arith.mulf %28, %29 : vector<2x8x256xf32>
    %31 = arith.addf %27, %30 : vector<2x8x256xf32>
    %32 = arith.addf %0, %31 : vector<2x8x256xf32>
    %c1_i32 = arith.constant 1 : i32
    %c0_14 = arith.constant 0 : index
    %c0_15 = arith.constant 0 : index
    %33 = arith.index_cast %c1_i32 : i32 to index
    %c0_16 = arith.constant 0 : index
    %c0_17 = arith.constant 0 : index
    %34 = vector.load %arg4[%c0_14, %c0_15, %33, %c0_16, %c0_17] : memref<2x1x4x2x256xf32, #tpu.memory_space<vmem>>, vector<1x1x1x2x256xf32>
    %35 = vector.shape_cast %34 : vector<1x1x1x2x256xf32> to vector<2x256xf32>
    %c1_18 = arith.constant 1 : index
    %c0_19 = arith.constant 0 : index
    %36 = arith.index_cast %c1_i32 : i32 to index
    %c0_20 = arith.constant 0 : index
    %c0_21 = arith.constant 0 : index
    %37 = vector.load %arg4[%c1_18, %c0_19, %36, %c0_20, %c0_21] : memref<2x1x4x2x256xf32, #tpu.memory_space<vmem>>, vector<1x1x1x2x256xf32>
    %38 = vector.shape_cast %37 : vector<1x1x1x2x256xf32> to vector<2x256xf32>
    %c0_22 = arith.constant 0 : index
    %c0_23 = arith.constant 0 : index
    %39 = arith.index_cast %c1_i32 : i32 to index
    %c0_24 = arith.constant 0 : index
    %c0_25 = arith.constant 0 : index
    %40 = vector.load %arg5[%c0_22, %c0_23, %39, %c0_24, %c0_25] : memref<2x1x4x8x256xf32, #tpu.memory_space<vmem>>, vector<1x1x1x8x256xf32>
    %41 = vector.shape_cast %40 : vector<1x1x1x8x256xf32> to vector<8x256xf32>
    %c1_26 = arith.constant 1 : index
    %c0_27 = arith.constant 0 : index
    %42 = arith.index_cast %c1_i32 : i32 to index
    %c0_28 = arith.constant 0 : index
    %c0_29 = arith.constant 0 : index
    %43 = vector.load %arg5[%c1_26, %c0_27, %42, %c0_28, %c0_29] : memref<2x1x4x8x256xf32, #tpu.memory_space<vmem>>, vector<1x1x1x8x256xf32>
    %44 = vector.shape_cast %43 : vector<1x1x1x8x256xf32> to vector<8x256xf32>
    %45 = vector.shape_cast %35 : vector<2x256xf32> to vector<2x1x256xf32>
    %46 = vector.shape_cast %38 : vector<2x256xf32> to vector<2x1x256xf32>
    %47 = vector.shape_cast %41 : vector<8x256xf32> to vector<1x8x256xf32>
    %48 = vector.shape_cast %44 : vector<8x256xf32> to vector<1x8x256xf32>
    %49 = vector.broadcast %45 : vector<2x1x256xf32> to vector<2x8x256xf32>
    %50 = vector.broadcast %47 : vector<1x8x256xf32> to vector<2x8x256xf32>
    %51 = arith.mulf %49, %50 : vector<2x8x256xf32>
    %52 = vector.broadcast %46 : vector<2x1x256xf32> to vector<2x8x256xf32>
    %53 = vector.broadcast %48 : vector<1x8x256xf32> to vector<2x8x256xf32>
    %54 = arith.mulf %52, %53 : vector<2x8x256xf32>
    %55 = arith.subf %51, %54 : vector<2x8x256xf32>
    %56 = arith.addf %24, %55 : vector<2x8x256xf32>
    %57 = vector.broadcast %46 : vector<2x1x256xf32> to vector<2x8x256xf32>
    %58 = vector.broadcast %47 : vector<1x8x256xf32> to vector<2x8x256xf32>
    %59 = arith.mulf %57, %58 : vector<2x8x256xf32>
    %60 = vector.broadcast %45 : vector<2x1x256xf32> to vector<2x8x256xf32>
    %61 = vector.broadcast %48 : vector<1x8x256xf32> to vector<2x8x256xf32>
    %62 = arith.mulf %60, %61 : vector<2x8x256xf32>
    %63 = arith.addf %59, %62 : vector<2x8x256xf32>
    %64 = arith.addf %32, %63 : vector<2x8x256xf32>
    %c2_i32 = arith.constant 2 : i32
    %c0_30 = arith.constant 0 : index
    %c0_31 = arith.constant 0 : index
    %65 = arith.index_cast %c2_i32 : i32 to index
    %c0_32 = arith.constant 0 : index
    %c0_33 = arith.constant 0 : index
    %66 = vector.load %arg4[%c0_30, %c0_31, %65, %c0_32, %c0_33] : memref<2x1x4x2x256xf32, #tpu.memory_space<vmem>>, vector<1x1x1x2x256xf32>
    %67 = vector.shape_cast %66 : vector<1x1x1x2x256xf32> to vector<2x256xf32>
    %c1_34 = arith.constant 1 : index
    %c0_35 = arith.constant 0 : index
    %68 = arith.index_cast %c2_i32 : i32 to index
    %c0_36 = arith.constant 0 : index
    %c0_37 = arith.constant 0 : index
    %69 = vector.load %arg4[%c1_34, %c0_35, %68, %c0_36, %c0_37] : memref<2x1x4x2x256xf32, #tpu.memory_space<vmem>>, vector<1x1x1x2x256xf32>
    %70 = vector.shape_cast %69 : vector<1x1x1x2x256xf32> to vector<2x256xf32>
    %c0_38 = arith.constant 0 : index
    %c0_39 = arith.constant 0 : index
    %71 = arith.index_cast %c2_i32 : i32 to index
    %c0_40 = arith.constant 0 : index
    %c0_41 = arith.constant 0 : index
    %72 = vector.load %arg5[%c0_38, %c0_39, %71, %c0_40, %c0_41] : memref<2x1x4x8x256xf32, #tpu.memory_space<vmem>>, vector<1x1x1x8x256xf32>
    %73 = vector.shape_cast %72 : vector<1x1x1x8x256xf32> to vector<8x256xf32>
    %c1_42 = arith.constant 1 : index
    %c0_43 = arith.constant 0 : index
    %74 = arith.index_cast %c2_i32 : i32 to index
    %c0_44 = arith.constant 0 : index
    %c0_45 = arith.constant 0 : index
    %75 = vector.load %arg5[%c1_42, %c0_43, %74, %c0_44, %c0_45] : memref<2x1x4x8x256xf32, #tpu.memory_space<vmem>>, vector<1x1x1x8x256xf32>
    %76 = vector.shape_cast %75 : vector<1x1x1x8x256xf32> to vector<8x256xf32>
    %77 = vector.shape_cast %67 : vector<2x256xf32> to vector<2x1x256xf32>
    %78 = vector.shape_cast %70 : vector<2x256xf32> to vector<2x1x256xf32>
    %79 = vector.shape_cast %73 : vector<8x256xf32> to vector<1x8x256xf32>
    %80 = vector.shape_cast %76 : vector<8x256xf32> to vector<1x8x256xf32>
    %81 = vector.broadcast %77 : vector<2x1x256xf32> to vector<2x8x256xf32>
    %82 = vector.broadcast %79 : vector<1x8x256xf32> to vector<2x8x256xf32>
    %83 = arith.mulf %81, %82 : vector<2x8x256xf32>
    %84 = vector.broadcast %78 : vector<2x1x256xf32> to vector<2x8x256xf32>
    %85 = vector.broadcast %80 : vector<1x8x256xf32> to vector<2x8x256xf32>
    %86 = arith.mulf %84, %85 : vector<2x8x256xf32>
    %87 = arith.subf %83, %86 : vector<2x8x256xf32>
    %88 = arith.addf %56, %87 : vector<2x8x256xf32>
    %89 = vector.broadcast %78 : vector<2x1x256xf32> to vector<2x8x256xf32>
    %90 = vector.broadcast %79 : vector<1x8x256xf32> to vector<2x8x256xf32>
    %91 = arith.mulf %89, %90 : vector<2x8x256xf32>
    %92 = vector.broadcast %77 : vector<2x1x256xf32> to vector<2x8x256xf32>
    %93 = vector.broadcast %80 : vector<1x8x256xf32> to vector<2x8x256xf32>
    %94 = arith.mulf %92, %93 : vector<2x8x256xf32>
    %95 = arith.addf %91, %94 : vector<2x8x256xf32>
    %96 = arith.addf %64, %95 : vector<2x8x256xf32>
    %c3_i32 = arith.constant 3 : i32
    %c0_46 = arith.constant 0 : index
    %c0_47 = arith.constant 0 : index
    %97 = arith.index_cast %c3_i32 : i32 to index
    %c0_48 = arith.constant 0 : index
    %c0_49 = arith.constant 0 : index
    %98 = vector.load %arg4[%c0_46, %c0_47, %97, %c0_48, %c0_49] : memref<2x1x4x2x256xf32, #tpu.memory_space<vmem>>, vector<1x1x1x2x256xf32>
    %99 = vector.shape_cast %98 : vector<1x1x1x2x256xf32> to vector<2x256xf32>
    %c1_50 = arith.constant 1 : index
    %c0_51 = arith.constant 0 : index
    %100 = arith.index_cast %c3_i32 : i32 to index
    %c0_52 = arith.constant 0 : index
    %c0_53 = arith.constant 0 : index
    %101 = vector.load %arg4[%c1_50, %c0_51, %100, %c0_52, %c0_53] : memref<2x1x4x2x256xf32, #tpu.memory_space<vmem>>, vector<1x1x1x2x256xf32>
    %102 = vector.shape_cast %101 : vector<1x1x1x2x256xf32> to vector<2x256xf32>
    %c0_54 = arith.constant 0 : index
    %c0_55 = arith.constant 0 : index
    %103 = arith.index_cast %c3_i32 : i32 to index
    %c0_56 = arith.constant 0 : index
    %c0_57 = arith.constant 0 : index
    %104 = vector.load %arg5[%c0_54, %c0_55, %103, %c0_56, %c0_57] : memref<2x1x4x8x256xf32, #tpu.memory_space<vmem>>, vector<1x1x1x8x256xf32>
    %105 = vector.shape_cast %104 : vector<1x1x1x8x256xf32> to vector<8x256xf32>
    %c1_58 = arith.constant 1 : index
    %c0_59 = arith.constant 0 : index
    %106 = arith.index_cast %c3_i32 : i32 to index
    %c0_60 = arith.constant 0 : index
    %c0_61 = arith.constant 0 : index
    %107 = vector.load %arg5[%c1_58, %c0_59, %106, %c0_60, %c0_61] : memref<2x1x4x8x256xf32, #tpu.memory_space<vmem>>, vector<1x1x1x8x256xf32>
    %108 = vector.shape_cast %107 : vector<1x1x1x8x256xf32> to vector<8x256xf32>
    %109 = vector.shape_cast %99 : vector<2x256xf32> to vector<2x1x256xf32>
    %110 = vector.shape_cast %102 : vector<2x256xf32> to vector<2x1x256xf32>
    %111 = vector.shape_cast %105 : vector<8x256xf32> to vector<1x8x256xf32>
    %112 = vector.shape_cast %108 : vector<8x256xf32> to vector<1x8x256xf32>
    %113 = vector.broadcast %109 : vector<2x1x256xf32> to vector<2x8x256xf32>
    %114 = vector.broadcast %111 : vector<1x8x256xf32> to vector<2x8x256xf32>
    %115 = arith.mulf %113, %114 : vector<2x8x256xf32>
    %116 = vector.broadcast %110 : vector<2x1x256xf32> to vector<2x8x256xf32>
    %117 = vector.broadcast %112 : vector<1x8x256xf32> to vector<2x8x256xf32>
    %118 = arith.mulf %116, %117 : vector<2x8x256xf32>
    %119 = arith.subf %115, %118 : vector<2x8x256xf32>
    %120 = arith.addf %88, %119 : vector<2x8x256xf32>
    %121 = vector.broadcast %110 : vector<2x1x256xf32> to vector<2x8x256xf32>
    %122 = vector.broadcast %111 : vector<1x8x256xf32> to vector<2x8x256xf32>
    %123 = arith.mulf %121, %122 : vector<2x8x256xf32>
    %124 = vector.broadcast %109 : vector<2x1x256xf32> to vector<2x8x256xf32>
    %125 = vector.broadcast %112 : vector<1x8x256xf32> to vector<2x8x256xf32>
    %126 = arith.mulf %124, %125 : vector<2x8x256xf32>
    %127 = arith.addf %123, %126 : vector<2x8x256xf32>
    %128 = arith.addf %96, %127 : vector<2x8x256xf32>
    %c4_i32 = arith.constant 4 : i32
    %c0_62 = arith.constant 0 : index
    %c0_63 = arith.constant 0 : index
    %c0_64 = arith.constant 0 : index
    %c0_65 = arith.constant 0 : index
    %c0_66 = arith.constant 0 : index
    %129 = vector.load %arg6[%c0_62, %c0_63, %c0_64, %c0_65, %c0_66] : memref<2x2x1x8x256xf32, #tpu.memory_space<vmem>>, vector<1x2x1x8x256xf32>
    %130 = vector.shape_cast %129 : vector<1x2x1x8x256xf32> to vector<2x8x256xf32>
    %131 = vector.shape_cast %120 : vector<2x8x256xf32> to vector<1x2x1x8x256xf32>
    tpu.vector_store %arg6[%c0_62, %c0_63, %c0_64, %c0_65, %c0_66], %131 {strides = array<i32>} : memref<2x2x1x8x256xf32, #tpu.memory_space<vmem>>, vector<1x2x1x8x256xf32>,
    %c1_67 = arith.constant 1 : index
    %c0_68 = arith.constant 0 : index
    %c0_69 = arith.constant 0 : index
    %c0_70 = arith.constant 0 : index
    %c0_71 = arith.constant 0 : index
    %132 = vector.load %arg6[%c1_67, %c0_68, %c0_69, %c0_70, %c0_71] : memref<2x2x1x8x256xf32, #tpu.memory_space<vmem>>, vector<1x2x1x8x256xf32>
    %133 = vector.shape_cast %132 : vector<1x2x1x8x256xf32> to vector<2x8x256xf32>
    %134 = vector.shape_cast %128 : vector<2x8x256xf32> to vector<1x2x1x8x256xf32>
    tpu.vector_store %arg6[%c1_67, %c0_68, %c0_69, %c0_70, %c0_71], %134 {strides = array<i32>} : memref<2x2x1x8x256xf32, #tpu.memory_space<vmem>>, vector<1x2x1x8x256xf32>,
    return
  }
  func.func @transform_0(%arg0: i32, %arg1: i32, %arg2: i32, %arg3: i32) -> (i32, i32, i32, i32, i32) {
    %c0_i32 = arith.constant 0 : i32
    %c0_i32_0 = arith.constant 0 : i32
    %c0_i32_1 = arith.constant 0 : i32
    return %c0_i32, %arg0, %c0_i32_0, %arg3, %arg2 : i32, i32, i32, i32, i32
  }
  func.func @transform_1(%arg0: i32, %arg1: i32, %arg2: i32, %arg3: i32) -> (i32, i32, i32, i32, i32) {
    %c0_i32 = arith.constant 0 : i32
    %c0_i32_0 = arith.constant 0 : i32
    %c0_i32_1 = arith.constant 0 : i32
    return %c0_i32, %arg0, %c0_i32_0, %arg1, %arg2 : i32, i32, i32, i32, i32
  }
  func.func @transform_2(%arg0: i32, %arg1: i32, %arg2: i32, %arg3: i32) -> (i32, i32, i32, i32, i32) {
    %c0_i32 = arith.constant 0 : i32
    %c0_i32_0 = arith.constant 0 : i32
    return %c0_i32, %arg3, %arg0, %arg1, %arg2 : i32, i32, i32, i32, i32
  }
}

</mosaic_0001>

<llo_original>
// kernel: fi_fft_conv.1
$region0: #{fi_fft_conv.1}
  #allocation0 [shape = 'u32[]', space=smem, size = 0x4, offset = 0x4, fixed_abs, tag = 'smem constant byte address 0x4 - core index']
  #allocation1 [shape = 'u32[144,128]{1,0:T(1,128)}', space=vmem, size = 0x12000, scoped, tag = 'internal scratch']
  %s0 = inlined_call_operand.vmem [shape: f32[2,1,4,2,180], index: 0, kind: input, shape index: {}]
  %s1 = inlined_call_operand.vmem [shape: f32[2,1,4,8,180], index: 1, kind: input, shape index: {}]
  %s2 = inlined_call_operand.vmem [shape: f32[2,2,1,8,180], index: 2, kind: output, shape index: {}]
  %s3 = sld [smem:[#allocation0]]
  $region18: #{fi_fft_conv.1} parent=0
    _
  %s5 = ssub.s32 1, %s3
  %s6 = scalar_select 0, %s5, %s3
  // Predicated region
  $region2: #{fi_fft_conv.1} parent=0 // pred_check
    _
  $region3: #{fi_fft_conv.1} parent=0 // pred_check_branch
    %8 = sbr.rel (0) target = $region5
  $region4: #{fi_fft_conv.1} parent=0 // pred_region
    _
  $region5: #{fi_fft_conv.1} parent=0 // pred_fallthru
    _
  // Predicated region
  $region6: #{fi_fft_conv.1} parent=0 // pred_check
    _
  $region7: #{fi_fft_conv.1} parent=0 // pred_check_branch
    %10 = sbr.rel (0) target = $region9
  $region8: #{fi_fft_conv.1} parent=0 // pred_region
    _
  $region9: #{fi_fft_conv.1} parent=0 // pred_fallthru
    _
  %v11 = vld [vmem:[%s0] sm:$0xf]
  %s12 = scalar_lea.vmem %s0, 16
  %v13 = vld [vmem:[%s12] sm:$0xf]
  %v14 = vld [vmem:[%s1] sm:$0xff]
  %v15 = vld [vmem:[%s1 + $0x8] sm:$0xff]
  %s16 = scalar_lea.vmem %s1, 64
  %v17 = vld [vmem:[%s16] sm:$0xff]
  %v18 = vld [vmem:[%s16 + $0x8] sm:$0xff]
  %v21 = vunpack.c.l.s4 1966171168
  %v22 = vunpack.c.0.s8 %v21
  %v23 = vlaneseq
  %v24 = vshrl.u32 %v23, 7
  %v25 = vsub.s32 %v22, %v24
  %v26 = vrot.slane %v11, %v25
  %v27 = vcombine.high %v26, %v26
  %v30 = vunpack.c.l.s4 1966171168
  %v31 = vunpack.c.0.s8 %v30
  %v32 = vlaneseq
  %v33 = vshrl.u32 %v32, 7
  %v34 = vsub.s32 %v31, %v33
  %v35 = vrot.slane %v13, %v34
  %v36 = vcombine.high %v35, %v35
  %v37 = vlaneseq
  %v38 = vshrl.u32 %v37, 7
  %v39 = vsub.s32 0, %v38
  %v40 = vrot.slane %v26, %v39
  %v41 = vlaneseq
  %v42 = vshrl.u32 %v41, 7
  %v43 = vsub.s32 1, %v42
  %v44 = vrot.slane %v26, %v43
  %v45 = vlaneseq
  %v46 = vshrl.u32 %v45, 7
  %v47 = vsub.s32 0, %v46
  %v48 = vrot.slane %v27, %v47
  %v49 = vlaneseq
  %v50 = vshrl.u32 %v49, 7
  %v51 = vsub.s32 1, %v50
  %v52 = vrot.slane %v27, %v51
  %v57 = vmul.f32 %v40, %v14
  %v58 = vmul.f32 %v44, %v15
  %v59 = vmul.f32 %v48, %v14
  %v60 = vmul.f32 %v52, %v15
  %v61 = vlaneseq
  %v62 = vshrl.u32 %v61, 7
  %v63 = vsub.s32 0, %v62
  %v64 = vrot.slane %v35, %v63
  %v65 = vlaneseq
  %v66 = vshrl.u32 %v65, 7
  %v67 = vsub.s32 1, %v66
  %v68 = vrot.slane %v35, %v67
  %v69 = vlaneseq
  %v70 = vshrl.u32 %v69, 7
  %v71 = vsub.s32 0, %v70
  %v72 = vrot.slane %v36, %v71
  %v73 = vlaneseq
  %v74 = vshrl.u32 %v73, 7
  %v75 = vsub.s32 1, %v74
  %v76 = vrot.slane %v36, %v75
  %v81 = vmul.f32 %v64, %v17
  %v82 = vmul.f32 %v68, %v18
  %v83 = vmul.f32 %v72, %v17
  %v84 = vmul.f32 %v76, %v18
  %v85 = vsub.f32 %v57, %v81
  %v86 = vsub.f32 %v58, %v82
  %v87 = vsub.f32 %v59, %v83
  %v88 = vsub.f32 %v60, %v84
  %v89 = vadd.f32 %v85, 0.0
  %v90 = vadd.f32 %v86, 0.0
  %v91 = vadd.f32 %v87, 0.0
  %v92 = vadd.f32 %v88, 0.0
  %v93 = vmul.f32 %v64, %v14
  %v94 = vmul.f32 %v68, %v15
  %v95 = vmul.f32 %v72, %v14
  %v96 = vmul.f32 %v76, %v15
  %v97 = vmul.f32 %v40, %v17
  %v98 = vmul.f32 %v44, %v18
  %v99 = vmul.f32 %v48, %v17
  %v100 = vmul.f32 %v52, %v18
  %v101 = vadd.f32 %v93, %v97
  %v102 = vadd.f32 %v94, %v98
  %v103 = vadd.f32 %v95, %v99
  %v104 = vadd.f32 %v96, %v100
  %v105 = vadd.f32 %v101, 0.0
  %v106 = vadd.f32 %v102, 0.0
  %v107 = vadd.f32 %v103, 0.0
  %v108 = vadd.f32 %v104, 0.0
  %s109 = scalar_lea.vmem %s0, 4
  %v110 = vld [vmem:[%s109] sm:$0xf]
  %s111 = scalar_lea.vmem %s0, 20
  %v112 = vld [vmem:[%s111] sm:$0xf]
  %s113 = scalar_lea.vmem %s1, 16
  %v114 = vld [vmem:[%s113] sm:$0xff]
  %v115 = vld [vmem:[%s113 + $0x8] sm:$0xff]
  %s116 = scalar_lea.vmem %s1, 80
  %v117 = vld [vmem:[%s116] sm:$0xff]
  %v118 = vld [vmem:[%s116 + $0x8] sm:$0xff]
  %v121 = vunpack.c.l.s4 1966171168
  %v122 = vunpack.c.0.s8 %v121
  %v123 = vlaneseq
  %v124 = vshrl.u32 %v123, 7
  %v125 = vsub.s32 %v122, %v124
  %v126 = vrot.slane %v110, %v125
  %v127 = vcombine.high %v126, %v126
  %v130 = vunpack.c.l.s4 1966171168
  %v131 = vunpack.c.0.s8 %v130
  %v132 = vlaneseq
  %v133 = vshrl.u32 %v132, 7
  %v134 = vsub.s32 %v131, %v133
  %v135 = vrot.slane %v112, %v134
  %v136 = vcombine.high %v135, %v135
  %v137 = vlaneseq
  %v138 = vshrl.u32 %v137, 7
  %v139 = vsub.s32 0, %v138
  %v140 = vrot.slane %v126, %v139
  %v141 = vlaneseq
  %v142 = vshrl.u32 %v141, 7
  %v143 = vsub.s32 1, %v142
  %v144 = vrot.slane %v126, %v143
  %v145 = vlaneseq
  %v146 = vshrl.u32 %v145, 7
  %v147 = vsub.s32 0, %v146
  %v148 = vrot.slane %v127, %v147
  %v149 = vlaneseq
  %v150 = vshrl.u32 %v149, 7
  %v151 = vsub.s32 1, %v150
  %v152 = vrot.slane %v127, %v151
  %v157 = vmul.f32 %v140, %v114
  %v158 = vmul.f32 %v144, %v115
  %v159 = vmul.f32 %v148, %v114
  %v160 = vmul.f32 %v152, %v115
  %v161 = vlaneseq
  %v162 = vshrl.u32 %v161, 7
  %v163 = vsub.s32 0, %v162
  %v164 = vrot.slane %v135, %v163
  %v165 = vlaneseq
  %v166 = vshrl.u32 %v165, 7
  %v167 = vsub.s32 1, %v166
  %v168 = vrot.slane %v135, %v167
  %v169 = vlaneseq
  %v170 = vshrl.u32 %v169, 7
  %v171 = vsub.s32 0, %v170
  %v172 = vrot.slane %v136, %v171
  %v173 = vlaneseq
  %v174 = vshrl.u32 %v173, 7
  %v175 = vsub.s32 1, %v174
  %v176 = vrot.slane %v136, %v175
  %v181 = vmul.f32 %v164, %v117
  %v182 = vmul.f32 %v168, %v118
  %v183 = vmul.f32 %v172, %v117
  %v184 = vmul.f32 %v176, %v118
  %v185 = vsub.f32 %v157, %v181
  %v186 = vsub.f32 %v158, %v182
  %v187 = vsub.f32 %v159, %v183
  %v188 = vsub.f32 %v160, %v184
  %v189 = vadd.f32 %v89, %v185
  %v190 = vadd.f32 %v90, %v186
  %v191 = vadd.f32 %v91, %v187
  %v192 = vadd.f32 %v92, %v188
  %v193 = vmul.f32 %v164, %v114
  %v194 = vmul.f32 %v168, %v115
  %v195 = vmul.f32 %v172, %v114
  %v196 = vmul.f32 %v176, %v115
  %v197 = vmul.f32 %v140, %v117
  %v198 = vmul.f32 %v144, %v118
  %v199 = vmul.f32 %v148, %v117
  %v200 = vmul.f32 %v152, %v118
  %v201 = vadd.f32 %v193, %v197
  %v202 = vadd.f32 %v194, %v198
  %v203 = vadd.f32 %v195, %v199
  %v204 = vadd.f32 %v196, %v200
  %v205 = vadd.f32 %v105, %v201
  %v206 = vadd.f32 %v106, %v202
  %v207 = vadd.f32 %v107, %v203
  %v208 = vadd.f32 %v108, %v204
  %s209 = scalar_lea.vmem %s0, 8
  %v210 = vld [vmem:[%s209] sm:$0xf]
  %s211 = scalar_lea.vmem %s0, 24
  %v212 = vld [vmem:[%s211] sm:$0xf]
  %s213 = scalar_lea.vmem %s1, 32
  %v214 = vld [vmem:[%s213] sm:$0xff]
  %v215 = vld [vmem:[%s213 + $0x8] sm:$0xff]
  %s216 = scalar_lea.vmem %s1, 96
  %v217 = vld [vmem:[%s216] sm:$0xff]
  %v218 = vld [vmem:[%s216 + $0x8] sm:$0xff]
  %v221 = vunpack.c.l.s4 1966171168
  %v222 = vunpack.c.0.s8 %v221
  %v223 = vlaneseq
  %v224 = vshrl.u32 %v223, 7
  %v225 = vsub.s32 %v222, %v224
  %v226 = vrot.slane %v210, %v225
  %v227 = vcombine.high %v226, %v226
  %v230 = vunpack.c.l.s4 1966171168
  %v231 = vunpack.c.0.s8 %v230
  %v232 = vlaneseq
  %v233 = vshrl.u32 %v232, 7
  %v234 = vsub.s32 %v231, %v233
  %v235 = vrot.slane %v212, %v234
  %v236 = vcombine.high %v235, %v235
  %v237 = vlaneseq
  %v238 = vshrl.u32 %v237, 7
  %v239 = vsub.s32 0, %v238
  %v240 = vrot.slane %v226, %v239
  %v241 = vlaneseq
  %v242 = vshrl.u32 %v241, 7
  %v243 = vsub.s32 1, %v242
  %v244 = vrot.slane %v226, %v243
  %v245 = vlaneseq
  %v246 = vshrl.u32 %v245, 7
  %v247 = vsub.s32 0, %v246
  %v248 = vrot.slane %v227, %v247
  %v249 = vlaneseq
  %v250 = vshrl.u32 %v249, 7
  %v251 = vsub.s32 1, %v250
  %v252 = vrot.slane %v227, %v251
  %v257 = vmul.f32 %v240, %v214
  %v258 = vmul.f32 %v244, %v215
  %v259 = vmul.f32 %v248, %v214
  %v260 = vmul.f32 %v252, %v215
  %v261 = vlaneseq
  %v262 = vshrl.u32 %v261, 7
  %v263 = vsub.s32 0, %v262
  %v264 = vrot.slane %v235, %v263
  %v265 = vlaneseq
  %v266 = vshrl.u32 %v265, 7
  %v267 = vsub.s32 1, %v266
  %v268 = vrot.slane %v235, %v267
  %v269 = vlaneseq
  %v270 = vshrl.u32 %v269, 7
  %v271 = vsub.s32 0, %v270
  %v272 = vrot.slane %v236, %v271
  %v273 = vlaneseq
  %v274 = vshrl.u32 %v273, 7
  %v275 = vsub.s32 1, %v274
  %v276 = vrot.slane %v236, %v275
  %v281 = vmul.f32 %v264, %v217
  %v282 = vmul.f32 %v268, %v218
  %v283 = vmul.f32 %v272, %v217
  %v284 = vmul.f32 %v276, %v218
  %v285 = vsub.f32 %v257, %v281
  %v286 = vsub.f32 %v258, %v282
  %v287 = vsub.f32 %v259, %v283
  %v288 = vsub.f32 %v260, %v284
  %v289 = vadd.f32 %v189, %v285
  %v290 = vadd.f32 %v190, %v286
  %v291 = vadd.f32 %v191, %v287
  %v292 = vadd.f32 %v192, %v288
  %v293 = vmul.f32 %v264, %v214
  %v294 = vmul.f32 %v268, %v215
  %v295 = vmul.f32 %v272, %v214
  %v296 = vmul.f32 %v276, %v215
  %v297 = vmul.f32 %v240, %v217
  %v298 = vmul.f32 %v244, %v218
  %v299 = vmul.f32 %v248, %v217
  %v300 = vmul.f32 %v252, %v218
  %v301 = vadd.f32 %v293, %v297
  %v302 = vadd.f32 %v294, %v298
  %v303 = vadd.f32 %v295, %v299
  %v304 = vadd.f32 %v296, %v300
  %v305 = vadd.f32 %v205, %v301
  %v306 = vadd.f32 %v206, %v302
  %v307 = vadd.f32 %v207, %v303
  %v308 = vadd.f32 %v208, %v304
  %s309 = scalar_lea.vmem %s0, 12
  %v310 = vld [vmem:[%s309] sm:$0xf]
  %s311 = scalar_lea.vmem %s0, 28
  %v312 = vld [vmem:[%s311] sm:$0xf]
  %s313 = scalar_lea.vmem %s1, 48
  %v314 = vld [vmem:[%s313] sm:$0xff]
  %v315 = vld [vmem:[%s313 + $0x8] sm:$0xff]
  %s316 = scalar_lea.vmem %s1, 112
  %v317 = vld [vmem:[%s316] sm:$0xff]
  %v318 = vld [vmem:[%s316 + $0x8] sm:$0xff]
  %v321 = vunpack.c.l.s4 1966171168
  %v322 = vunpack.c.0.s8 %v321
  %v323 = vlaneseq
  %v324 = vshrl.u32 %v323, 7
  %v325 = vsub.s32 %v322, %v324
  %v326 = vrot.slane %v310, %v325
  %v327 = vcombine.high %v326, %v326
  %v330 = vunpack.c.l.s4 1966171168
  %v331 = vunpack.c.0.s8 %v330
  %v332 = vlaneseq
  %v333 = vshrl.u32 %v332, 7
  %v334 = vsub.s32 %v331, %v333
  %v335 = vrot.slane %v312, %v334
  %v336 = vcombine.high %v335, %v335
  %v337 = vlaneseq
  %v338 = vshrl.u32 %v337, 7
  %v339 = vsub.s32 0, %v338
  %v340 = vrot.slane %v326, %v339
  %v341 = vlaneseq
  %v342 = vshrl.u32 %v341, 7
  %v343 = vsub.s32 1, %v342
  %v344 = vrot.slane %v326, %v343
  %v345 = vlaneseq
  %v346 = vshrl.u32 %v345, 7
  %v347 = vsub.s32 0, %v346
  %v348 = vrot.slane %v327, %v347
  %v349 = vlaneseq
  %v350 = vshrl.u32 %v349, 7
  %v351 = vsub.s32 1, %v350
  %v352 = vrot.slane %v327, %v351
  %v357 = vmul.f32 %v340, %v314
  %v358 = vmul.f32 %v344, %v315
  %v359 = vmul.f32 %v348, %v314
  %v360 = vmul.f32 %v352, %v315
  %v361 = vlaneseq
  %v362 = vshrl.u32 %v361, 7
  %v363 = vsub.s32 0, %v362
  %v364 = vrot.slane %v335, %v363
  %v365 = vlaneseq
  %v366 = vshrl.u32 %v365, 7
  %v367 = vsub.s32 1, %v366
  %v368 = vrot.slane %v335, %v367
  %v369 = vlaneseq
  %v370 = vshrl.u32 %v369, 7
  %v371 = vsub.s32 0, %v370
  %v372 = vrot.slane %v336, %v371
  %v373 = vlaneseq
  %v374 = vshrl.u32 %v373, 7
  %v375 = vsub.s32 1, %v374
  %v376 = vrot.slane %v336, %v375
  %v381 = vmul.f32 %v364, %v317
  %v382 = vmul.f32 %v368, %v318
  %v383 = vmul.f32 %v372, %v317
  %v384 = vmul.f32 %v376, %v318
  %v385 = vsub.f32 %v357, %v381
  %v386 = vsub.f32 %v358, %v382
  %v387 = vsub.f32 %v359, %v383
  %v388 = vsub.f32 %v360, %v384
  %v389 = vadd.f32 %v289, %v385
  %v390 = vadd.f32 %v290, %v386
  %v391 = vadd.f32 %v291, %v387
  %v392 = vadd.f32 %v292, %v388
  %v393 = vmul.f32 %v364, %v314
  %v394 = vmul.f32 %v368, %v315
  %v395 = vmul.f32 %v372, %v314
  %v396 = vmul.f32 %v376, %v315
  %v397 = vmul.f32 %v340, %v317
  %v398 = vmul.f32 %v344, %v318
  %v399 = vmul.f32 %v348, %v317
  %v400 = vmul.f32 %v352, %v318
  %v401 = vadd.f32 %v393, %v397
  %v402 = vadd.f32 %v394, %v398
  %v403 = vadd.f32 %v395, %v399
  %v404 = vadd.f32 %v396, %v400
  %v405 = vadd.f32 %v305, %v401
  %v406 = vadd.f32 %v306, %v402
  %v407 = vadd.f32 %v307, %v403
  %v408 = vadd.f32 %v308, %v404
  %409 = vst [vmem:[%s2] sm:$0xff] %v389
  %410 = vst [vmem:[%s2 + $0x8] sm:$0xff] %v390
  %411 = vst [vmem:[%s2 + $0x10] sm:$0xff] %v391
  %412 = vst [vmem:[%s2 + $0x18] sm:$0xff] %v392
  %s413 = scalar_lea.vmem %s2, 32
  %414 = vst [vmem:[%s413] sm:$0xff] %v405
  %415 = vst [vmem:[%s413 + $0x8] sm:$0xff] %v406
  %416 = vst [vmem:[%s413 + $0x10] sm:$0xff] %v407
  %417 = vst [vmem:[%s413 + $0x18] sm:$0xff] %v408
  // Predicated region
  $region10: #{fi_fft_conv.1} parent=0 // pred_check
    _
  $region11: #{fi_fft_conv.1} parent=0 // pred_check_branch
    %419 = sbr.rel (0) target = $region13
  $region12: #{fi_fft_conv.1} parent=0 // pred_region
    _
  $region13: #{fi_fft_conv.1} parent=0 // pred_fallthru
    _
  // Predicated region
  $region14: #{fi_fft_conv.1} parent=0 // pred_check
    _
  $region15: #{fi_fft_conv.1} parent=0 // pred_check_branch
    %421 = sbr.rel (0) target = $region17
  $region16: #{fi_fft_conv.1} parent=0 // pred_region
    _
  $region17: #{fi_fft_conv.1} parent=0 // pred_fallthru
    _

// kernel: reverse.0
$region0: #{reverse.0}
  %s0 = inlined_call_operand.vmem [shape: f32[2,8,18,8], index: 0, kind: input, shape index: {}]
  %s1 = inlined_call_operand.vmem [shape: f32[2,8,18,8], index: 1, kind: output, shape index: {}]
  $region1: #{reverse.0} parent=0
    #allocation0 [shape = 'u8[65536]{0}', space=vmem, size = 0x10000, scoped, tag = 'operand span for operand 0']
    #allocation1 [shape = 'u8[65536]{0}', space=vmem, size = 0x10000, scoped, tag = 'operand span for operand 1']
    // Predicated region
    $region2: #{reverse.0} parent=1 // pred_check
      _
    $region3: #{reverse.0} parent=1 // pred_check_branch
      %3 = sbr.rel (0) target = $region5
    $region4: #{reverse.0} parent=1 // pred_region
      // Predicated region
      $region6: #{reverse.0} parent=4 // pred_check
        _
      $region7: #{reverse.0} parent=4 // pred_check_branch
        %5 = sbr.rel (0) target = $region9
      $region8: #{reverse.0} parent=4 // pred_region
        // Predicated region
        $region21: #{reverse.0} parent=8 // pred_check
          _
        $region22: #{reverse.0} parent=8 // pred_check_branch
          %50 = sbr.rel (0) target = $region24
        $region23: #{reverse.0} parent=8 // pred_region
          loop: start=0, step=1, limit=1
          $region25: #{reverse.0} parent=23 // loop_pre_header
            _
          $region26: #{reverse.0} parent=23 // loop_header
            %s52 = sphi 0, %s56
            %p53 = scmp.ge.s32.totalorder %s52, 1
            %s57 = sphi %s0, %s0
            %s58 = sphi [#allocation0], [#allocation0]
          $region27: #{reverse.0} parent=23 // loop_header_branch
            %55 = sbr.rel (%p53) target = $region31
          $region28: #{reverse.0} parent=23 // loop_body
            %v59 = vld [vmem:[%s57] sm:$0xff]
            %60 = vst [vmem:[%s58] sm:$0xff] %v59
            %v61 = vld [vmem:[%s57 + $0x8] sm:$0xff]
            %62 = vst [vmem:[%s58 + $0x8] sm:$0xff] %v61
            %v63 = vld [vmem:[%s57 + $0x10] sm:$0xff]
            %64 = vst [vmem:[%s58 + $0x10] sm:$0xff] %v63
            %v65 = vld [vmem:[%s57 + $0x18] sm:$0xff]
            %66 = vst [vmem:[%s58 + $0x18] sm:$0xff] %v65
            %v67 = vld [vmem:[%s57 + $0x20] sm:$0xff]
            %68 = vst [vmem:[%s58 + $0x20] sm:$0xff] %v67
            %v69 = vld [vmem:[%s57 + $0x28] sm:$0xff]
            %70 = vst [vmem:[%s58 + $0x28] sm:$0xff] %v69
            %v71 = vld [vmem:[%s57 + $0x30] sm:$0xff]
            %72 = vst [vmem:[%s58 + $0x30] sm:$0xff] %v71
            %v73 = vld [vmem:[%s57 + $0x38] sm:$0xff]
            %74 = vst [vmem:[%s58 + $0x38] sm:$0xff] %v73
            %v75 = vld [vmem:[%s57 + $0x40] sm:$0xff]
            %76 = vst [vmem:[%s58 + $0x40] sm:$0xff] %v75
            %v77 = vld [vmem:[%s57 + $0x48] sm:$0xff]
            %78 = vst [vmem:[%s58 + $0x48] sm:$0xff] %v77
            %v79 = vld [vmem:[%s57 + $0x50] sm:$0xff]
            %80 = vst [vmem:[%s58 + $0x50] sm:$0xff] %v79
            %v81 = vld [vmem:[%s57 + $0x58] sm:$0xff]
            %82 = vst [vmem:[%s58 + $0x58] sm:$0xff] %v81
            %v83 = vld [vmem:[%s57 + $0x60] sm:$0xff]
            %84 = vst [vmem:[%s58 + $0x60] sm:$0xff] %v83
            %v85 = vld [vmem:[%s57 + $0x68] sm:$0xff]
            %86 = vst [vmem:[%s58 + $0x68] sm:$0xff] %v85
            %v87 = vld [vmem:[%s57 + $0x70] sm:$0xff]
            %88 = vst [vmem:[%s58 + $0x70] sm:$0xff] %v87
            %v89 = vld [vmem:[%s57 + $0x78] sm:$0xff]
            %90 = vst [vmem:[%s58 + $0x78] sm:$0xff] %v89
          $region29: #{reverse.0} parent=23 // loop_footer
            %s56 = sadd.s32 1, %s52
          $region30: #{reverse.0} parent=23 // loop_footer_branch
            %51 = sbr.rel target = $region26
          $region31: #{reverse.0} parent=23 // loop_exit
            _
        $region24: #{reverse.0} parent=8 // pred_fallthru
          _
        // Predicated region
        $region32: #{reverse.0} parent=8 // pred_check
          _
        $region33: #{reverse.0} parent=8 // pred_check_branch
          %92 = sbr.rel target = $region35
        $region34: #{reverse.0} parent=8 // pred_region
          _
        $region35: #{reverse.0} parent=8 // pred_fallthru
          _
      $region9: #{reverse.0} parent=4 // pred_fallthru
        _
      // Predicated region
      $region10: #{reverse.0} parent=4 // pred_check
        _
      $region11: #{reverse.0} parent=4 // pred_check_branch
        %7 = sbr.rel target = $region13
      $region12: #{reverse.0} parent=4 // pred_region
        loop: start=0, step=1, limit=1
        $region14: #{reverse.0} parent=12 // loop_pre_header
          _
        $region15: #{reverse.0} parent=12 // loop_header
          %s10 = sphi 0, %s14
          %p11 = scmp.ge.s32.totalorder %s10, 1
          %s15 = sphi %s0, %s0
          %s16 = sphi [#allocation0], [#allocation0]
        $region16: #{reverse.0} parent=12 // loop_header_branch
          %13 = sbr.rel (%p11) target = $region20
        $region17: #{reverse.0} parent=12 // loop_body
          %v17 = vld [vmem:[%s15] sm:$0xff]
          %18 = vst [vmem:[%s16] sm:$0xff] %v17
          %v19 = vld [vmem:[%s15 + $0x8] sm:$0xff]
          %20 = vst [vmem:[%s16 + $0x8] sm:$0xff] %v19
          %v21 = vld [vmem:[%s15 + $0x10] sm:$0xff]
          %22 = vst [vmem:[%s16 + $0x10] sm:$0xff] %v21
          %v23 = vld [vmem:[%s15 + $0x18] sm:$0xff]
          %24 = vst [vmem:[%s16 + $0x18] sm:$0xff] %v23
          %v25 = vld [vmem:[%s15 + $0x20] sm:$0xff]
          %26 = vst [vmem:[%s16 + $0x20] sm:$0xff] %v25
          %v27 = vld [vmem:[%s15 + $0x28] sm:$0xff]
          %28 = vst [vmem:[%s16 + $0x28] sm:$0xff] %v27
          %v29 = vld [vmem:[%s15 + $0x30] sm:$0xff]
          %30 = vst [vmem:[%s16 + $0x30] sm:$0xff] %v29
          %v31 = vld [vmem:[%s15 + $0x38] sm:$0xff]
          %32 = vst [vmem:[%s16 + $0x38] sm:$0xff] %v31
          %v33 = vld [vmem:[%s15 + $0x40] sm:$0xff]
          %34 = vst [vmem:[%s16 + $0x40] sm:$0xff] %v33
          %v35 = vld [vmem:[%s15 + $0x48] sm:$0xff]
          %36 = vst [vmem:[%s16 + $0x48] sm:$0xff] %v35
          %v37 = vld [vmem:[%s15 + $0x50] sm:$0xff]
          %38 = vst [vmem:[%s16 + $0x50] sm:$0xff] %v37
          %v39 = vld [vmem:[%s15 + $0x58] sm:$0xff]
          %40 = vst [vmem:[%s16 + $0x58] sm:$0xff] %v39
          %v41 = vld [vmem:[%s15 + $0x60] sm:$0xff]
          %42 = vst [vmem:[%s16 + $0x60] sm:$0xff] %v41
          %v43 = vld [vmem:[%s15 + $0x68] sm:$0xff]
          %44 = vst [vmem:[%s16 + $0x68] sm:$0xff] %v43
          %v45 = vld [vmem:[%s15 + $0x70] sm:$0xff]
          %46 = vst [vmem:[%s16 + $0x70] sm:$0xff] %v45
          %v47 = vld [vmem:[%s15 + $0x78] sm:$0xff]
          %48 = vst [vmem:[%s16 + $0x78] sm:$0xff] %v47
        $region18: #{reverse.0} parent=12 // loop_footer
          %s14 = sadd.s32 1, %s10
        $region19: #{reverse.0} parent=12 // loop_footer_branch
          %9 = sbr.rel target = $region15
        $region20: #{reverse.0} parent=12 // loop_exit
          _
      $region13: #{reverse.0} parent=4 // pred_fallthru
        _
    $region5: #{reverse.0} parent=1 // pred_fallthru
      _
    %93 = vnop
    %s94 = scalar_lea.vmem [#allocation0], 7
    %v95 = vld [vmem:[%s94] ss:$-1 sm:$0xff]
    %96 = vst [vmem:[#allocation1] sm:$0xff] %v95
    %s97 = scalar_lea.vmem [#allocation1], 8
    %s98 = scalar_lea.vmem [#allocation0], 8
    %s99 = scalar_lea.vmem %s98, 7 [#allocation0]
    %v100 = vld [vmem:[%s99] ss:$-1 sm:$0xff]
    %101 = vst [vmem:[%s97] sm:$0xff] %v100
    %s102 = scalar_lea.vmem [#allocation1], 16
    %s103 = scalar_lea.vmem [#allocation0], 16
    %s104 = scalar_lea.vmem %s103, 7 [#allocation0]
    %v105 = vld [vmem:[%s104] ss:$-1 sm:$0xff]
    %106 = vst [vmem:[%s102] sm:$0xff] %v105
    %s107 = scalar_lea.vmem [#allocation1], 24
    %s108 = scalar_lea.vmem [#allocation0], 24
    %s109 = scalar_lea.vmem %s108, 7 [#allocation0]
    %v110 = vld [vmem:[%s109] ss:$-1 sm:$0xff]
    %111 = vst [vmem:[%s107] sm:$0xff] %v110
    %s112 = scalar_lea.vmem [#allocation1], 32
    %s113 = scalar_lea.vmem [#allocation0], 32
    %s114 = scalar_lea.vmem %s113, 7 [#allocation0]
    %v115 = vld [vmem:[%s114] ss:$-1 sm:$0xff]
    %116 = vst [vmem:[%s112] sm:$0xff] %v115
    %s117 = scalar_lea.vmem [#allocation1], 40
    %s118 = scalar_lea.vmem [#allocation0], 40
    %s119 = scalar_lea.vmem %s118, 7 [#allocation0]
    %v120 = vld [vmem:[%s119] ss:$-1 sm:$0xff]
    %121 = vst [vmem:[%s117] sm:$0xff] %v120
    %s122 = scalar_lea.vmem [#allocation1], 48
    %s123 = scalar_lea.vmem [#allocation0], 48
    %s124 = scalar_lea.vmem %s123, 7 [#allocation0]
    %v125 = vld [vmem:[%s124] ss:$-1 sm:$0xff]
    %126 = vst [vmem:[%s122] sm:$0xff] %v125
    %s127 = scalar_lea.vmem [#allocation1], 56
    %s128 = scalar_lea.vmem [#allocation0], 56
    %s129 = scalar_lea.vmem %s128, 7 [#allocation0]
    %v130 = vld [vmem:[%s129] ss:$-1 sm:$0xff]
    %131 = vst [vmem:[%s127] sm:$0xff] %v130
    %s132 = scalar_lea.vmem [#allocation1], 64
    %s133 = scalar_lea.vmem [#allocation0], 64
    %s134 = scalar_lea.vmem %s133, 7 [#allocation0]
    %v135 = vld [vmem:[%s134] ss:$-1 sm:$0xff]
    %136 = vst [vmem:[%s132] sm:$0xff] %v135
    %s137 = scalar_lea.vmem [#allocation1], 72
    %s138 = scalar_lea.vmem [#allocation0], 72
    %s139 = scalar_lea.vmem %s138, 7 [#allocation0]
    %v140 = vld [vmem:[%s139] ss:$-1 sm:$0xff]
    %141 = vst [vmem:[%s137] sm:$0xff] %v140
    %s142 = scalar_lea.vmem [#allocation1], 80
    %s143 = scalar_lea.vmem [#allocation0], 80
    %s144 = scalar_lea.vmem %s143, 7 [#allocation0]
    %v145 = vld [vmem:[%s144] ss:$-1 sm:$0xff]
    %146 = vst [vmem:[%s142] sm:$0xff] %v145
    %s147 = scalar_lea.vmem [#allocation1], 88
    %s148 = scalar_lea.vmem [#allocation0], 88
    %s149 = scalar_lea.vmem %s148, 7 [#allocation0]
    %v150 = vld [vmem:[%s149] ss:$-1 sm:$0xff]
    %151 = vst [vmem:[%s147] sm:$0xff] %v150
    %s152 = scalar_lea.vmem [#allocation1], 96
    %s153 = scalar_lea.vmem [#allocation0], 96
    %s154 = scalar_lea.vmem %s153, 7 [#allocation0]
    %v155 = vld [vmem:[%s154] ss:$-1 sm:$0xff]
    %156 = vst [vmem:[%s152] sm:$0xff] %v155
    %s157 = scalar_lea.vmem [#allocation1], 104
    %s158 = scalar_lea.vmem [#allocation0], 104
    %s159 = scalar_lea.vmem %s158, 7 [#allocation0]
    %v160 = vld [vmem:[%s159] ss:$-1 sm:$0xff]
    %161 = vst [vmem:[%s157] sm:$0xff] %v160
    %s162 = scalar_lea.vmem [#allocation1], 112
    %s163 = scalar_lea.vmem [#allocation0], 112
    %s164 = scalar_lea.vmem %s163, 7 [#allocation0]
    %v165 = vld [vmem:[%s164] ss:$-1 sm:$0xff]
    %166 = vst [vmem:[%s162] sm:$0xff] %v165
    %s167 = scalar_lea.vmem [#allocation1], 120
    %s168 = scalar_lea.vmem [#allocation0], 120
    %s169 = scalar_lea.vmem %s168, 7 [#allocation0]
    %v170 = vld [vmem:[%s169] ss:$-1 sm:$0xff]
    %171 = vst [vmem:[%s167] sm:$0xff] %v170
    // Predicated region
    $region36: #{reverse.0} parent=1 // pred_check
      _
    $region37: #{reverse.0} parent=1 // pred_check_branch
      %173 = sbr.rel (0) target = $region39
    $region38: #{reverse.0} parent=1 // pred_region
      // Predicated region
      $region40: #{reverse.0} parent=38 // pred_check
        _
      $region41: #{reverse.0} parent=38 // pred_check_branch
        %175 = sbr.rel (0) target = $region43
      $region42: #{reverse.0} parent=38 // pred_region
        // Predicated region
        $region55: #{reverse.0} parent=42 // pred_check
          _
        $region56: #{reverse.0} parent=42 // pred_check_branch
          %220 = sbr.rel (0) target = $region58
        $region57: #{reverse.0} parent=42 // pred_region
          loop: start=0, step=1, limit=1
          $region59: #{reverse.0} parent=57 // loop_pre_header
            _
          $region60: #{reverse.0} parent=57 // loop_header
            %s222 = sphi 0, %s226
            %p223 = scmp.ge.s32.totalorder %s222, 1
            %s227 = sphi [#allocation1], [#allocation1]
            %s228 = sphi %s1, %s1
          $region61: #{reverse.0} parent=57 // loop_header_branch
            %225 = sbr.rel (%p223) target = $region65
          $region62: #{reverse.0} parent=57 // loop_body
            %v229 = vld [vmem:[%s227] sm:$0xff]
            %230 = vst [vmem:[%s228] sm:$0xff] %v229
            %v231 = vld [vmem:[%s227 + $0x8] sm:$0xff]
            %232 = vst [vmem:[%s228 + $0x8] sm:$0xff] %v231
            %v233 = vld [vmem:[%s227 + $0x10] sm:$0xff]
            %234 = vst [vmem:[%s228 + $0x10] sm:$0xff] %v233
            %v235 = vld [vmem:[%s227 + $0x18] sm:$0xff]
            %236 = vst [vmem:[%s228 + $0x18] sm:$0xff] %v235
            %v237 = vld [vmem:[%s227 + $0x20] sm:$0xff]
            %238 = vst [vmem:[%s228 + $0x20] sm:$0xff] %v237
            %v239 = vld [vmem:[%s227 + $0x28] sm:$0xff]
            %240 = vst [vmem:[%s228 + $0x28] sm:$0xff] %v239
            %v241 = vld [vmem:[%s227 + $0x30] sm:$0xff]
            %242 = vst [vmem:[%s228 + $0x30] sm:$0xff] %v241
            %v243 = vld [vmem:[%s227 + $0x38] sm:$0xff]
            %244 = vst [vmem:[%s228 + $0x38] sm:$0xff] %v243
            %v245 = vld [vmem:[%s227 + $0x40] sm:$0xff]
            %246 = vst [vmem:[%s228 + $0x40] sm:$0xff] %v245
            %v247 = vld [vmem:[%s227 + $0x48] sm:$0xff]
            %248 = vst [vmem:[%s228 + $0x48] sm:$0xff] %v247
            %v249 = vld [vmem:[%s227 + $0x50] sm:$0xff]
            %250 = vst [vmem:[%s228 + $0x50] sm:$0xff] %v249
            %v251 = vld [vmem:[%s227 + $0x58] sm:$0xff]
            %252 = vst [vmem:[%s228 + $0x58] sm:$0xff] %v251
            %v253 = vld [vmem:[%s227 + $0x60] sm:$0xff]
            %254 = vst [vmem:[%s228 + $0x60] sm:$0xff] %v253
            %v255 = vld [vmem:[%s227 + $0x68] sm:$0xff]
            %256 = vst [vmem:[%s228 + $0x68] sm:$0xff] %v255
            %v257 = vld [vmem:[%s227 + $0x70] sm:$0xff]
            %258 = vst [vmem:[%s228 + $0x70] sm:$0xff] %v257
            %v259 = vld [vmem:[%s227 + $0x78] sm:$0xff]
            %260 = vst [vmem:[%s228 + $0x78] sm:$0xff] %v259
          $region63: #{reverse.0} parent=57 // loop_footer
            %s226 = sadd.s32 1, %s222
          $region64: #{reverse.0} parent=57 // loop_footer_branch
            %221 = sbr.rel target = $region60
          $region65: #{reverse.0} parent=57 // loop_exit
            _
        $region58: #{reverse.0} parent=42 // pred_fallthru
          _
        // Predicated region
        $region66: #{reverse.0} parent=42 // pred_check
          _
        $region67: #{reverse.0} parent=42 // pred_check_branch
          %262 = sbr.rel target = $region69
        $region68: #{reverse.0} parent=42 // pred_region
          _
        $region69: #{reverse.0} parent=42 // pred_fallthru
          _
      $region43: #{reverse.0} parent=38 // pred_fallthru
        _
      // Predicated region
      $region44: #{reverse.0} parent=38 // pred_check
        _
      $region45: #{reverse.0} parent=38 // pred_check_branch
        %177 = sbr.rel target = $region47
      $region46: #{reverse.0} parent=38 // pred_region
        loop: start=0, step=1, limit=1
        $region48: #{reverse.0} parent=46 // loop_pre_header
          _
        $region49: #{reverse.0} parent=46 // loop_header
          %s180 = sphi 0, %s184
          %p181 = scmp.ge.s32.totalorder %s180, 1
          %s185 = sphi [#allocation1], [#allocation1]
          %s186 = sphi %s1, %s1
        $region50: #{reverse.0} parent=46 // loop_header_branch
          %183 = sbr.rel (%p181) target = $region54
        $region51: #{reverse.0} parent=46 // loop_body
          %v187 = vld [vmem:[%s185] sm:$0xff]
          %188 = vst [vmem:[%s186] sm:$0xff] %v187
          %v189 = vld [vmem:[%s185 + $0x8] sm:$0xff]
          %190 = vst [vmem:[%s186 + $0x8] sm:$0xff] %v189
          %v191 = vld [vmem:[%s185 + $0x10] sm:$0xff]
          %192 = vst [vmem:[%s186 + $0x10] sm:$0xff] %v191
          %v193 = vld [vmem:[%s185 + $0x18] sm:$0xff]
          %194 = vst [vmem:[%s186 + $0x18] sm:$0xff] %v193
          %v195 = vld [vmem:[%s185 + $0x20] sm:$0xff]
          %196 = vst [vmem:[%s186 + $0x20] sm:$0xff] %v195
          %v197 = vld [vmem:[%s185 + $0x28] sm:$0xff]
          %198 = vst [vmem:[%s186 + $0x28] sm:$0xff] %v197
          %v199 = vld [vmem:[%s185 + $0x30] sm:$0xff]
          %200 = vst [vmem:[%s186 + $0x30] sm:$0xff] %v199
          %v201 = vld [vmem:[%s185 + $0x38] sm:$0xff]
          %202 = vst [vmem:[%s186 + $0x38] sm:$0xff] %v201
          %v203 = vld [vmem:[%s185 + $0x40] sm:$0xff]
          %204 = vst [vmem:[%s186 + $0x40] sm:$0xff] %v203
          %v205 = vld [vmem:[%s185 + $0x48] sm:$0xff]
          %206 = vst [vmem:[%s186 + $0x48] sm:$0xff] %v205
          %v207 = vld [vmem:[%s185 + $0x50] sm:$0xff]
          %208 = vst [vmem:[%s186 + $0x50] sm:$0xff] %v207
          %v209 = vld [vmem:[%s185 + $0x58] sm:$0xff]
          %210 = vst [vmem:[%s186 + $0x58] sm:$0xff] %v209
          %v211 = vld [vmem:[%s185 + $0x60] sm:$0xff]
          %212 = vst [vmem:[%s186 + $0x60] sm:$0xff] %v211
          %v213 = vld [vmem:[%s185 + $0x68] sm:$0xff]
          %214 = vst [vmem:[%s186 + $0x68] sm:$0xff] %v213
          %v215 = vld [vmem:[%s185 + $0x70] sm:$0xff]
          %216 = vst [vmem:[%s186 + $0x70] sm:$0xff] %v215
          %v217 = vld [vmem:[%s185 + $0x78] sm:$0xff]
          %218 = vst [vmem:[%s186 + $0x78] sm:$0xff] %v217
        $region52: #{reverse.0} parent=46 // loop_footer
          %s184 = sadd.s32 1, %s180
        $region53: #{reverse.0} parent=46 // loop_footer_branch
          %179 = sbr.rel target = $region49
        $region54: #{reverse.0} parent=46 // loop_exit
          _
      $region47: #{reverse.0} parent=38 // pred_fallthru
        _
    $region39: #{reverse.0} parent=1 // pred_fallthru
      _
    %263 = vnop

</llo_original>
